<compile_context>
chip_gen: v7x
topology: tpu7x:2x2x1
jax: 0.10.0
libtpu: 0.0.40
codegen_flags: <defaults>
</compile_context>

<pallas_src>
import math

import jax
import jax.numpy as jnp
from jax import lax
from jax.experimental import pallas as pl
from jax.experimental.pallas import tpu as pltpu


def _critic_kernel(y_ref, fea_ref, wy_ref, by_ref, w1a_ref, w1b_ref, b1_ref,
                   w2_ref, b2_ref, o_ref):
    # Contract dim 1 of lhs with dim 1 of rhs (== x @ W^T, PyTorch Linear).
    dn = (((1,), (1,)), ((), ()))

    # fc_y: [TILE_M, T] x [D, T] -> [TILE_M, D]
    h1 = lax.dot_general(y_ref[...], wy_ref[...], dn,
                         preferred_element_type=jnp.float32) + by_ref[...]

    # critic[0] + ReLU, with the concat folded into the weight split:
    # relu(h1 @ W1a^T + fea @ W1b^T + b1) -> [TILE_M, D4]
    h2 = lax.dot_general(h1, w1a_ref[...], dn, preferred_element_type=jnp.float32)
    h2 = h2 + lax.dot_general(fea_ref[...], w1b_ref[...], dn,
                              preferred_element_type=jnp.float32)
    h2 = jnp.maximum(h2 + b1_ref[...], 0.0)

    # critic[2] + Sigmoid, computed transposed: [1, D4] x [TILE_M, D4] -> [1, TILE_M]
    logits = lax.dot_general(w2_ref[...], h2, dn,
                             preferred_element_type=jnp.float32) + b2_ref[...]
    o_ref[...] = jax.nn.sigmoid(logits).astype(o_ref.dtype)


def _round_up(x, m):
    return ((x + m - 1) // m) * m


def critic_func(y, fea, w_y, b_y, w1, b1, w2, b2, *, tile_m=512):
    """Forward of CriticFunc.

    y:   [..., seq_len + pred_len]
    fea: [..., emb_dim]
    w_y: [emb_dim, seq_len + pred_len], b_y: [emb_dim]        (PyTorch layouts)
    w1:  [emb_dim // 4, 2 * emb_dim],   b1:  [emb_dim // 4]
    w2:  [1, emb_dim // 4],             b2:  [1]
    returns: [..., 1]
    """
    *batch, T = y.shape
    D = fea.shape[-1]
    D4 = w1.shape[0]
    assert w_y.shape == (D, T)
    assert w1.shape == (D4, 2 * D)
    assert w2.shape == (1, D4)

    M = int(math.prod(batch)) if batch else 1
    y2d = y.reshape(M, T)
    fea2d = fea.reshape(M, D)

    # Row tiling: lane-dense tiles (multiples of 128), capped at tile_m.
    tile = min(tile_m, _round_up(M, 128))
    m_pad = _round_up(M, tile)
    if m_pad != M:
        y2d = jnp.pad(y2d, ((0, m_pad - M), (0, 0)))
        fea2d = jnp.pad(fea2d, ((0, m_pad - M), (0, 0)))

    # One-time weight split replacing the torch.cat; biases reshaped for broadcast.
    w1a = w1[:, :D]
    w1b = w1[:, D:]
    by2 = b_y.reshape(1, D)
    b1_2 = b1.reshape(1, D4)
    b2_2 = b2.reshape(1, 1)

    out = pl.pallas_call(
        _critic_kernel,
        out_shape=jax.ShapeDtypeStruct((1, m_pad), y.dtype),
        grid=(m_pad // tile,),
        in_specs=[
            pl.BlockSpec((tile, T), lambda i: (i, 0)),   # y rows
            pl.BlockSpec((tile, D), lambda i: (i, 0)),   # fea rows
            pl.BlockSpec((D, T), lambda i: (0, 0)),      # W_y (broadcast)
            pl.BlockSpec((1, D), lambda i: (0, 0)),      # b_y
            pl.BlockSpec((D4, D), lambda i: (0, 0)),     # W1a
            pl.BlockSpec((D4, D), lambda i: (0, 0)),     # W1b
            pl.BlockSpec((1, D4), lambda i: (0, 0)),     # b1
            pl.BlockSpec((1, D4), lambda i: (0, 0)),     # W2
            pl.BlockSpec((1, 1), lambda i: (0, 0)),      # b2
        ],
        out_specs=pl.BlockSpec((1, tile), lambda i: (0, i)),  # lane-dense rows
        compiler_params=pltpu.CompilerParams(
            dimension_semantics=("parallel",),
        ),
    )(y2d, fea2d, w_y, by2, w1a, w1b, b1_2, w2, b2_2)

    # [1, m_pad] -> [..., 1]; dropping padded rows + reshape (no data movement).
    return out[0, :M].reshape(*batch, 1)


if __name__ == "__main__":
    seq_len, pred_len, emb_dim = 8, 8, 32
    T = seq_len + pred_len           # 16
    D4 = emb_dim // 4                # 8
    B, N = 2, 8                      # batch, channels/series

    key = jax.random.PRNGKey(0)
    ks = jax.random.split(key, 5)

    # Parameters in PyTorch nn.Linear layout ([out, in]) with its default-style init.
    def lin_init(k, fan_out, fan_in):
        kw, kb = jax.random.split(k)
        bound = 1.0 / math.sqrt(fan_in)
        w = jax.random.uniform(kw, (fan_out, fan_in), jnp.float32, -bound, bound)
        b = jax.random.uniform(kb, (fan_out,), jnp.float32, -bound, bound)
        return w, b

    w_y, b_y = lin_init(ks[0], emb_dim, T)
    w1, b1 = lin_init(ks[1], D4, 2 * emb_dim)
    w2, b2 = lin_init(ks[2], 1, D4)

    y = jax.random.normal(ks[3], (B, N, T), dtype=jnp.float32)
    fea = jax.random.normal(ks[4], (B, N, emb_dim), dtype=jnp.float32)

    out = critic_func(y, fea, w_y, b_y, w1, b1, w2, b2)
    out = jax.block_until_ready(out)

    # Pure-JAX reference (matches the PyTorch forward).
    h1 = jnp.einsum("bnt,dt->bnd", y, w_y) + b_y
    cat = jnp.concatenate([h1, fea], axis=-1)
    h2 = jnp.maximum(jnp.einsum("bnc,oc->bno", cat, w1) + b1, 0.0)
    ref = jax.nn.sigmoid(jnp.einsum("bno,po->bnp", h2, w2) + b2)

    assert out.shape == (B, N, 1), out.shape
    assert jnp.allclose(out, ref, atol=1e-5, rtol=1e-5), float(jnp.max(jnp.abs(out - ref)))

    print("KERNEL_OK")
</pallas_src>

<mosaic_0001>
module attributes {stable_mosaic.version = 11 : i64} {
  func.func @_critic_kernel(%arg0: i32, %arg1: memref<128x16xf32, #tpu.memory_space<vmem>>, %arg2: memref<128x32xf32, #tpu.memory_space<vmem>>, %arg3: memref<32x16xf32, #tpu.memory_space<vmem>>, %arg4: memref<1x32xf32, #tpu.memory_space<vmem>>, %arg5: memref<8x32xf32, #tpu.memory_space<vmem>>, %arg6: memref<8x32xf32, #tpu.memory_space<vmem>>, %arg7: memref<1x8xf32, #tpu.memory_space<vmem>>, %arg8: memref<1x8xf32, #tpu.memory_space<vmem>>, %arg9: memref<1x1xf32, #tpu.memory_space<vmem>>, %arg10: memref<1x128xf32, #tpu.memory_space<vmem>>) attributes {dimension_semantics = [#tpu.dimension_semantics<parallel>], iteration_bounds = array<i64: 1>, scalar_prefetch = 0 : i64, scratch_operands = 0 : i64, tpu.core_type = #tpu.core_type<tc>, window_params = [{transform_indices = @transform_0, window_bounds = array<i64: 128, 16>}, {transform_indices = @transform_1, window_bounds = array<i64: 128, 32>}, {pipeline_mode = #tpu.pipeline_mode<synchronous>, transform_indices = @transform_2, window_bounds = array<i64: 32, 16>}, {pipeline_mode = #tpu.pipeline_mode<synchronous>, transform_indices = @transform_3, window_bounds = array<i64: 1, 32>}, {pipeline_mode = #tpu.pipeline_mode<synchronous>, transform_indices = @transform_4, window_bounds = array<i64: 8, 32>}, {pipeline_mode = #tpu.pipeline_mode<synchronous>, transform_indices = @transform_5, window_bounds = array<i64: 8, 32>}, {pipeline_mode = #tpu.pipeline_mode<synchronous>, transform_indices = @transform_6, window_bounds = array<i64: 1, 8>}, {pipeline_mode = #tpu.pipeline_mode<synchronous>, transform_indices = @transform_7, window_bounds = array<i64: 1, 8>}, {pipeline_mode = #tpu.pipeline_mode<synchronous>, transform_indices = @transform_8, window_bounds = array<i64: 1, 1>}, {transform_indices = @transform_9, window_bounds = array<i64: 1, 128>}]} {
    %c0 = arith.constant 0 : index
    %c0_0 = arith.constant 0 : index
    %0 = vector.load %arg1[%c0, %c0_0] : memref<128x16xf32, #tpu.memory_space<vmem>>, vector<128x16xf32>
    %c0_1 = arith.constant 0 : index
    %c0_2 = arith.constant 0 : index
    %1 = vector.load %arg3[%c0_1, %c0_2] : memref<32x16xf32, #tpu.memory_space<vmem>>, vector<32x16xf32>
    %cst = arith.constant dense<0.000000e+00> : vector<128x32xf32>
    %2 = tpu.matmul %0, %1, %cst {dimension_numbers = #tpu.dot_dimension_numbers<[1], [1], [0], [0], [0, 0, 1, 0], [], []>} : vector<128x16xf32>, vector<32x16xf32>, vector<128x32xf32> -> vector<128x32xf32>
    %c0_3 = arith.constant 0 : index
    %c0_4 = arith.constant 0 : index
    %3 = vector.load %arg4[%c0_3, %c0_4] : memref<1x32xf32, #tpu.memory_space<vmem>>, vector<1x32xf32>
    %4 = vector.broadcast %3 : vector<1x32xf32> to vector<128x32xf32>
    %5 = arith.addf %2, %4 : vector<128x32xf32>
    %c0_5 = arith.constant 0 : index
    %c0_6 = arith.constant 0 : index
    %6 = vector.load %arg5[%c0_5, %c0_6] : memref<8x32xf32, #tpu.memory_space<vmem>>, vector<8x32xf32>
    %cst_7 = arith.constant dense<0.000000e+00> : vector<128x8xf32>
    %7 = tpu.matmul %5, %6, %cst_7 {dimension_numbers = #tpu.dot_dimension_numbers<[1], [1], [0], [0], [0, 0, 1, 0], [], []>} : vector<128x32xf32>, vector<8x32xf32>, vector<128x8xf32> -> vector<128x8xf32>
    %c0_8 = arith.constant 0 : index
    %c0_9 = arith.constant 0 : index
    %8 = vector.load %arg2[%c0_8, %c0_9] : memref<128x32xf32, #tpu.memory_space<vmem>>, vector<128x32xf32>
    %c0_10 = arith.constant 0 : index
    %c0_11 = arith.constant 0 : index
    %9 = vector.load %arg6[%c0_10, %c0_11] : memref<8x32xf32, #tpu.memory_space<vmem>>, vector<8x32xf32>
    %cst_12 = arith.constant dense<0.000000e+00> : vector<128x8xf32>
    %10 = tpu.matmul %8, %9, %cst_12 {dimension_numbers = #tpu.dot_dimension_numbers<[1], [1], [0], [0], [0, 0, 1, 0], [], []>} : vector<128x32xf32>, vector<8x32xf32>, vector<128x8xf32> -> vector<128x8xf32>
    %11 = arith.addf %7, %10 : vector<128x8xf32>
    %c0_13 = arith.constant 0 : index
    %c0_14 = arith.constant 0 : index
    %12 = vector.load %arg7[%c0_13, %c0_14] : memref<1x8xf32, #tpu.memory_space<vmem>>, vector<1x8xf32>
    %13 = vector.broadcast %12 : vector<1x8xf32> to vector<128x8xf32>
    %14 = arith.addf %11, %13 : vector<128x8xf32>
    %cst_15 = arith.constant 0.000000e+00 : f32
    %15 = vector.broadcast %cst_15 : f32 to vector<128x8xf32>
    %16 = arith.maximumf %14, %15 : vector<128x8xf32>
    %c0_16 = arith.constant 0 : index
    %c0_17 = arith.constant 0 : index
    %17 = vector.load %arg8[%c0_16, %c0_17] : memref<1x8xf32, #tpu.memory_space<vmem>>, vector<1x8xf32>
    %cst_18 = arith.constant dense<0.000000e+00> : vector<1x128xf32>
    %18 = tpu.matmul %17, %16, %cst_18 {dimension_numbers = #tpu.dot_dimension_numbers<[1], [1], [0], [0], [0, 0, 1, 0], [], []>} : vector<1x8xf32>, vector<128x8xf32>, vector<1x128xf32> -> vector<1x128xf32>
    %c0_19 = arith.constant 0 : index
    %c0_20 = arith.constant 0 : index
    %19 = vector.load %arg9[%c0_19, %c0_20] : memref<1x1xf32, #tpu.memory_space<vmem>>, vector<1x1xf32>
    %20 = vector.broadcast %19 : vector<1x1xf32> to vector<1x128xf32>
    %21 = arith.addf %18, %20 : vector<1x128xf32>
    %22 = arith.negf %21 : vector<1x128xf32>
    %23 = math.exp %22 : vector<1x128xf32>
    %cst_21 = arith.constant 1.000000e+00 : f32
    %24 = vector.broadcast %cst_21 : f32 to vector<1x128xf32>
    %25 = arith.addf %24, %23 : vector<1x128xf32>
    %26 = arith.divf %24, %25 : vector<1x128xf32>
    %c0_22 = arith.constant 0 : index
    %c0_23 = arith.constant 0 : index
    %27 = vector.load %arg10[%c0_22, %c0_23] : memref<1x128xf32, #tpu.memory_space<vmem>>, vector<1x128xf32>
    tpu.vector_store %arg10[%c0_22, %c0_23], %26 {strides = array<i32>} : memref<1x128xf32, #tpu.memory_space<vmem>>, vector<1x128xf32>,
    return
  }
  func.func @transform_0(%arg0: i32) -> (i32, i32) {
    %c0_i32 = arith.constant 0 : i32
    %c0_i32_0 = arith.constant 0 : i32
    return %arg0, %c0_i32 : i32, i32
  }
  func.func @transform_1(%arg0: i32) -> (i32, i32) {
    %c0_i32 = arith.constant 0 : i32
    %c0_i32_0 = arith.constant 0 : i32
    return %arg0, %c0_i32 : i32, i32
  }
  func.func @transform_2(%arg0: i32) -> (i32, i32) {
    %c0_i32 = arith.constant 0 : i32
    %c0_i32_0 = arith.constant 0 : i32
    %c0_i32_1 = arith.constant 0 : i32
    return %c0_i32, %c0_i32_0 : i32, i32
  }
  func.func @transform_3(%arg0: i32) -> (i32, i32) {
    %c0_i32 = arith.constant 0 : i32
    %c0_i32_0 = arith.constant 0 : i32
    %c0_i32_1 = arith.constant 0 : i32
    return %c0_i32, %c0_i32_0 : i32, i32
  }
  func.func @transform_4(%arg0: i32) -> (i32, i32) {
    %c0_i32 = arith.constant 0 : i32
    %c0_i32_0 = arith.constant 0 : i32
    %c0_i32_1 = arith.constant 0 : i32
    return %c0_i32, %c0_i32_0 : i32, i32
  }
  func.func @transform_5(%arg0: i32) -> (i32, i32) {
    %c0_i32 = arith.constant 0 : i32
    %c0_i32_0 = arith.constant 0 : i32
    %c0_i32_1 = arith.constant 0 : i32
    return %c0_i32, %c0_i32_0 : i32, i32
  }
  func.func @transform_6(%arg0: i32) -> (i32, i32) {
    %c0_i32 = arith.constant 0 : i32
    %c0_i32_0 = arith.constant 0 : i32
    %c0_i32_1 = arith.constant 0 : i32
    return %c0_i32, %c0_i32_0 : i32, i32
  }
  func.func @transform_7(%arg0: i32) -> (i32, i32) {
    %c0_i32 = arith.constant 0 : i32
    %c0_i32_0 = arith.constant 0 : i32
    %c0_i32_1 = arith.constant 0 : i32
    return %c0_i32, %c0_i32_0 : i32, i32
  }
  func.func @transform_8(%arg0: i32) -> (i32, i32) {
    %c0_i32 = arith.constant 0 : i32
    %c0_i32_0 = arith.constant 0 : i32
    %c0_i32_1 = arith.constant 0 : i32
    return %c0_i32, %c0_i32_0 : i32, i32
  }
  func.func @transform_9(%arg0: i32) -> (i32, i32) {
    %c0_i32 = arith.constant 0 : i32
    %c0_i32_0 = arith.constant 0 : i32
    return %c0_i32, %arg0 : i32, i32
  }
}

</mosaic_0001>

<llo_original>
// kernel: tpu_custom_call.1
$region0: #{tpu_custom_call.1}
  #allocation0 [shape = 'u32[]', space=smem, size = 0x4, offset = 0x4, fixed_abs, tag = 'smem constant byte address 0x4 - core index']
  #allocation1 [shape = 'u32[144,128]{1,0:T(1,128)}', space=vmem, size = 0x12000, scoped, tag = 'internal scratch']
  #allocation2 [shape = 'f32[1,1]{1,0:T(1,128)S(1)}', space=vmem, size = 0x200, scoped, tag = 'scoped memory for tpu_custom_call.1']
  %s0 = inlined_call_operand.vmem [shape: f32[128,16], index: 0, kind: input, shape index: {}]
  %s1 = inlined_call_operand.vmem [shape: f32[128,32], index: 1, kind: input, shape index: {}]
  %s2 = inlined_call_operand.vmem [shape: f32[32,16], index: 2, kind: input, shape index: {}]
  %s3 = inlined_call_operand.vmem [shape: f32[1,32], index: 3, kind: input, shape index: {}]
  %s4 = inlined_call_operand.vmem [shape: f32[8,32], index: 4, kind: input, shape index: {}]
  %s5 = inlined_call_operand.vmem [shape: f32[8,32], index: 5, kind: input, shape index: {}]
  %s6 = inlined_call_operand.vmem [shape: f32[1,8], index: 6, kind: input, shape index: {}]
  %s7 = inlined_call_operand.vmem [shape: f32[1,8], index: 7, kind: input, shape index: {}]
  %s8 = inlined_call_operand.<no memory space> [shape: f32[1,1], index: 8, kind: input, shape index: {}]
  %s9 = inlined_call_operand.hbm [shape: f32[1,128], index: 9, kind: output, shape index: {}]
  %s10 = sld [smem:[#allocation0]]
  $region46: #{tpu_custom_call.1} parent=0
    _
  %s12 = ssub.s32 1, %s10
  %s13 = scalar_select 0, %s12, %s10
  %v14 = vstv %s8
  %15 = vst [vmem:[#allocation2] sm:$0x1] %v14
  $region1: #{tpu_custom_call.1} parent=0
    #allocation3 [shape = 'u8[512]{0}', space=vmem, size = 0x400, scoped, tag = 'output window, operand 0, single buffered']
    #allocation4 [shape = 's32[1]{0}', space=sflag, size = 0x4, scoped, tag = 'scoped memory for tpu_custom_call.1']
    %16 = vsyncpa [#allocation4], 0
    // Predicated region
    $region2: #{tpu_custom_call.1} parent=1 // pred_check
      _
    $region3: #{tpu_custom_call.1} parent=1 // pred_check_branch
      %18 = sbr.rel (0) target = $region5
    $region4: #{tpu_custom_call.1} parent=1 // pred_region
      _
    $region5: #{tpu_custom_call.1} parent=1 // pred_fallthru
      _
    // Predicated region
    $region6: #{tpu_custom_call.1} parent=1 // pred_check
      _
    $region7: #{tpu_custom_call.1} parent=1 // pred_check_branch
      %20 = sbr.rel (0) target = $region9
    $region8: #{tpu_custom_call.1} parent=1 // pred_region
      _
    $region9: #{tpu_custom_call.1} parent=1 // pred_fallthru
      _
    // Predicated region
    $region10: #{tpu_custom_call.1} parent=1 // pred_check
      _
    $region11: #{tpu_custom_call.1} parent=1 // pred_check_branch
      %22 = sbr.rel (0) target = $region13
    $region12: #{tpu_custom_call.1} parent=1 // pred_region
      _
    $region13: #{tpu_custom_call.1} parent=1 // pred_fallthru
      _
    // Predicated region
    $region14: #{tpu_custom_call.1} parent=1 // pred_check
      _
    $region15: #{tpu_custom_call.1} parent=1 // pred_check_branch
      %24 = sbr.rel (0) target = $region17
    $region16: #{tpu_custom_call.1} parent=1 // pred_region
      _
    $region17: #{tpu_custom_call.1} parent=1 // pred_fallthru
      _
    // Predicated region
    $region18: #{tpu_custom_call.1} parent=1 // pred_check
      _
    $region19: #{tpu_custom_call.1} parent=1 // pred_check_branch
      %26 = sbr.rel (0) target = $region21
    $region20: #{tpu_custom_call.1} parent=1 // pred_region
      _
    $region21: #{tpu_custom_call.1} parent=1 // pred_fallthru
      _
    // Predicated region
    $region22: #{tpu_custom_call.1} parent=1 // pred_check
      _
    $region23: #{tpu_custom_call.1} parent=1 // pred_check_branch
      %28 = sbr.rel (0) target = $region25
    $region24: #{tpu_custom_call.1} parent=1 // pred_region
      _
    $region25: #{tpu_custom_call.1} parent=1 // pred_fallthru
      _
    // Predicated region
    $region26: #{tpu_custom_call.1} parent=1 // pred_check
      _
    $region27: #{tpu_custom_call.1} parent=1 // pred_check_branch
      %30 = sbr.rel (0) target = $region29
    $region28: #{tpu_custom_call.1} parent=1 // pred_region
      _
    $region29: #{tpu_custom_call.1} parent=1 // pred_fallthru
      _
    // Predicated region
    $region30: #{tpu_custom_call.1} parent=1 // pred_check
      _
    $region31: #{tpu_custom_call.1} parent=1 // pred_check_branch
      %32 = sbr.rel (0) target = $region33
    $region32: #{tpu_custom_call.1} parent=1 // pred_region
      _
    $region33: #{tpu_custom_call.1} parent=1 // pred_fallthru
      _
    // Predicated region
    $region34: #{tpu_custom_call.1} parent=1 // pred_check
      _
    $region35: #{tpu_custom_call.1} parent=1 // pred_check_branch
      %34 = sbr.rel (0) target = $region37
    $region36: #{tpu_custom_call.1} parent=1 // pred_region
      _
    $region37: #{tpu_custom_call.1} parent=1 // pred_fallthru
      _
    %v35 = vld [vmem:[%s0] sm:$0xff]
    %v36 = vld [vmem:[%s0 + $0x8] sm:$0xff]
    %v37 = vld [vmem:[%s0 + $0x10] sm:$0xff]
    %v38 = vld [vmem:[%s0 + $0x18] sm:$0xff]
    %v39 = vld [vmem:[%s0 + $0x20] sm:$0xff]
    %v40 = vld [vmem:[%s0 + $0x28] sm:$0xff]
    %v41 = vld [vmem:[%s0 + $0x30] sm:$0xff]
    %v42 = vld [vmem:[%s0 + $0x38] sm:$0xff]
    %v43 = vld [vmem:[%s0 + $0x40] sm:$0xff]
    %v44 = vld [vmem:[%s0 + $0x48] sm:$0xff]
    %v45 = vld [vmem:[%s0 + $0x50] sm:$0xff]
    %v46 = vld [vmem:[%s0 + $0x58] sm:$0xff]
    %v47 = vld [vmem:[%s0 + $0x60] sm:$0xff]
    %v48 = vld [vmem:[%s0 + $0x68] sm:$0xff]
    %v49 = vld [vmem:[%s0 + $0x70] sm:$0xff]
    %v50 = vld [vmem:[%s0 + $0x78] sm:$0xff]
    %v51 = vld [vmem:[%s2] sm:$0xff]
    %v52 = vld [vmem:[%s2 + $0x8] sm:$0xff]
    %v53 = vld [vmem:[%s2 + $0x10] sm:$0xff]
    %v54 = vld [vmem:[%s2 + $0x18] sm:$0xff]
    %v55 = vld [vmem:[%s3] sm:$0x1]
    %v57 = vlaneseq
    %v58 = vshrl.u32 %v57, 7
    %v59 = vsub.s32 0, %v58
    %v60 = vrot.slane %v55, %v59
    %vm62 = vcmask 130048
    %v64 = vsel %vm62, %v35, 0
    %v67 = vsel %vm62, %v36, 0
    %v70 = vsel %vm62, %v37, 0
    %v73 = vsel %vm62, %v38, 0
    %v76 = vsel %vm62, %v39, 0
    %v79 = vsel %vm62, %v40, 0
    %v82 = vsel %vm62, %v41, 0
    %v85 = vsel %vm62, %v42, 0
    %v88 = vsel %vm62, %v43, 0
    %v91 = vsel %vm62, %v44, 0
    %v94 = vsel %vm62, %v45, 0
    %v97 = vsel %vm62, %v46, 0
    %v100 = vsel %vm62, %v47, 0
    %v103 = vsel %vm62, %v48, 0
    %v106 = vsel %vm62, %v49, 0
    %v109 = vsel %vm62, %v50, 0
    %v112 = vsel %vm62, %v51, 0
    %v115 = vsel %vm62, %v52, 0
    %v118 = vsel %vm62, %v53, 0
    %v121 = vsel %vm62, %v54, 0
    %123 = vmatprep.subr.mxu0 0.0
    %124 = vmatpush1.xpose.msra.mxu0 %v112
    %125 = vmatprep.subr.mxu0 0.0
    %126 = vmatpush1.xpose.msra.mxu0 %v115
    %127 = vmatprep.subr.mxu0 0.0
    %128 = vmatpush1.xpose.msra.mxu0 %v118
    %129 = vmatprep.subr.mxu0 0.0
    %130 = vmatpush1.xpose.msra.mxu0 %v121
    %131 = vmatprep.subr.mxu0 0.0
    %132 = vmatpush1.xpose.msra.mxu0 0.0
    %133 = vmatprep.subr.mxu0 0.0
    %134 = vmatpush1.xpose.msra.mxu0 0.0
    %135 = vmatprep.subr.mxu0 0.0
    %136 = vmatpush1.xpose.msra.mxu0 0.0
    %137 = vmatprep.subr.mxu0 0.0
    %138 = vmatpush1.xpose.msra.mxu0 0.0
    %139 = vmatprep.subr.mxu0 0.0
    %140 = vmatpush1.xpose.msra.mxu0 0.0
    %141 = vmatprep.subr.mxu0 0.0
    %142 = vmatpush1.xpose.msra.mxu0 0.0
    %143 = vmatprep.subr.mxu0 0.0
    %144 = vmatpush1.xpose.msra.mxu0 0.0
    %145 = vmatprep.subr.mxu0 0.0
    %146 = vmatpush1.xpose.msra.mxu0 0.0
    %147 = vmatprep.subr.mxu0 0.0
    %148 = vmatpush1.xpose.msra.mxu0 0.0
    %149 = vmatprep.subr.mxu0 0.0
    %150 = vmatpush1.xpose.msra.mxu0 0.0
    %151 = vmatprep.subr.mxu0 0.0
    %152 = vmatpush1.xpose.msra.mxu0 0.0
    %153 = vmatprep.subr.mxu0 0.0
    %154 = vmatpush1.xpose.msra.mxu0 0.0
    %155 = vmatprep.subr.mxu0 0.0
    %156 = vmatpush1.xpose.msra.mxu0 0.0
    %157 = vmatprep.subr.mxu0 0.0
    %158 = vmatpush1.xpose.msra.mxu0 0.0
    %159 = vmatprep.subr.mxu0 0.0
    %160 = vmatpush1.xpose.msra.mxu0 0.0
    %161 = vmatprep.subr.mxu0 0.0
    %162 = vmatpush1.xpose.msra.mxu0 0.0
    %163 = vmatprep.subr.mxu0 0.0
    %164 = vmatpush1.xpose.msra.mxu0 0.0
    %165 = vmatprep.subr.mxu0 0.0
    %166 = vmatpush1.xpose.msra.mxu0 0.0
    %167 = vmatprep.subr.mxu0 0.0
    %168 = vmatpush1.xpose.msra.mxu0 0.0
    %169 = vmatprep.subr.mxu0 0.0
    %170 = vmatpush1.xpose.msra.mxu0 0.0
    %171 = vmatprep.subr.mxu0 0.0
    %172 = vmatpush1.xpose.msra.mxu0 0.0
    %173 = vmatprep.subr.mxu0 0.0
    %174 = vmatpush1.xpose.msra.mxu0 0.0
    %175 = vmatprep.subr.mxu0 0.0
    %176 = vmatpush1.xpose.msra.mxu0 0.0
    %177 = vmatprep.subr.mxu0 0.0
    %178 = vmatpush1.xpose.msra.mxu0 0.0
    %179 = vmatprep.subr.mxu0 0.0
    %180 = vmatpush1.xpose.msra.mxu0 0.0
    %181 = vmatprep.subr.mxu0 0.0
    %182 = vmatpush1.xpose.msra.mxu0 0.0
    %183 = vmatprep.subr.mxu0 0.0
    %184 = vmatpush1.xpose.msra.mxu0 0.0
    %185 = vmatprep.subr.mxu0 0.0
    %186 = vmatpush1.xpose.msra.mxu0 0.0
    %187 = vmatprep.mubr.f32.mxu0 0.0
    %188 = vmatmul.mubr.f32.gmra.mrb[0].mxu0 %v64
    %v189 = vpop.f32.mrb[0].mxu0
    %v190 = vadd.f32 %v60, %v189
    %v191 = vpop.f32.mrb[0].mxu0
    %192 = vmatprep.mubr.f32.mxu0 0.0
    %193 = vmatmul.mubr.f32.gmra.mrb[0].mxu0 %v67
    %v194 = vpop.f32.mrb[0].mxu0
    %v195 = vadd.f32 %v60, %v194
    %v196 = vpop.f32.mrb[0].mxu0
    %197 = vmatprep.mubr.f32.mxu0 0.0
    %198 = vmatmul.mubr.f32.gmra.mrb[0].mxu0 %v70
    %v199 = vpop.f32.mrb[0].mxu0
    %v200 = vadd.f32 %v60, %v199
    %v201 = vpop.f32.mrb[0].mxu0
    %202 = vmatprep.mubr.f32.mxu0 0.0
    %203 = vmatmul.mubr.f32.gmra.mrb[0].mxu0 %v73
    %v204 = vpop.f32.mrb[0].mxu0
    %v205 = vadd.f32 %v60, %v204
    %v206 = vpop.f32.mrb[0].mxu0
    %207 = vmatprep.mubr.f32.mxu0 0.0
    %208 = vmatmul.mubr.f32.gmra.mrb[0].mxu0 %v76
    %v209 = vpop.f32.mrb[0].mxu0
    %v210 = vadd.f32 %v60, %v209
    %v211 = vpop.f32.mrb[0].mxu0
    %212 = vmatprep.mubr.f32.mxu0 0.0
    %213 = vmatmul.mubr.f32.gmra.mrb[0].mxu0 %v79
    %v214 = vpop.f32.mrb[0].mxu0
    %v215 = vadd.f32 %v60, %v214
    %v216 = vpop.f32.mrb[0].mxu0
    %217 = vmatprep.mubr.f32.mxu0 0.0
    %218 = vmatmul.mubr.f32.gmra.mrb[0].mxu0 %v82
    %v219 = vpop.f32.mrb[0].mxu0
    %v220 = vadd.f32 %v60, %v219
    %v221 = vpop.f32.mrb[0].mxu0
    %222 = vmatprep.mubr.f32.mxu0 0.0
    %223 = vmatmul.mubr.f32.gmra.mrb[0].mxu0 %v85
    %v224 = vpop.f32.mrb[0].mxu0
    %v225 = vadd.f32 %v60, %v224
    %v226 = vpop.f32.mrb[0].mxu0
    %227 = vmatprep.mubr.f32.mxu0 0.0
    %228 = vmatmul.mubr.f32.gmra.mrb[0].mxu0 %v88
    %v229 = vpop.f32.mrb[0].mxu0
    %v230 = vadd.f32 %v60, %v229
    %v231 = vpop.f32.mrb[0].mxu0
    %232 = vmatprep.mubr.f32.mxu0 0.0
    %233 = vmatmul.mubr.f32.gmra.mrb[0].mxu0 %v91
    %v234 = vpop.f32.mrb[0].mxu0
    %v235 = vadd.f32 %v60, %v234
    %v236 = vpop.f32.mrb[0].mxu0
    %237 = vmatprep.mubr.f32.mxu0 0.0
    %238 = vmatmul.mubr.f32.gmra.mrb[0].mxu0 %v94
    %v239 = vpop.f32.mrb[0].mxu0
    %v240 = vadd.f32 %v60, %v239
    %v241 = vpop.f32.mrb[0].mxu0
    %242 = vmatprep.mubr.f32.mxu0 0.0
    %243 = vmatmul.mubr.f32.gmra.mrb[0].mxu0 %v97
    %v244 = vpop.f32.mrb[0].mxu0
    %v245 = vadd.f32 %v60, %v244
    %v246 = vpop.f32.mrb[0].mxu0
    %247 = vmatprep.mubr.f32.mxu0 0.0
    %248 = vmatmul.mubr.f32.gmra.mrb[0].mxu0 %v100
    %v249 = vpop.f32.mrb[0].mxu0
    %v250 = vadd.f32 %v60, %v249
    %v251 = vpop.f32.mrb[0].mxu0
    %252 = vmatprep.mubr.f32.mxu0 0.0
    %253 = vmatmul.mubr.f32.gmra.mrb[0].mxu0 %v103
    %v254 = vpop.f32.mrb[0].mxu0
    %v255 = vadd.f32 %v60, %v254
    %v256 = vpop.f32.mrb[0].mxu0
    %257 = vmatprep.mubr.f32.mxu0 0.0
    %258 = vmatmul.mubr.f32.gmra.mrb[0].mxu0 %v106
    %v259 = vpop.f32.mrb[0].mxu0
    %v260 = vadd.f32 %v60, %v259
    %v261 = vpop.f32.mrb[0].mxu0
    %262 = vmatprep.mubr.f32.mxu0 0.0
    %263 = vmatmul.mubr.f32.gmra.mrb[0].mxu0 %v109
    %v264 = vpop.f32.mrb[0].mxu0
    %v265 = vadd.f32 %v60, %v264
    %v266 = vpop.f32.mrb[0].mxu0
    %267 = vdwg.mxu0
    %v268 = vld [vmem:[%s4] sm:$0xff]
    %v269 = vld [vmem:[%s1] sm:$0xff]
    %v270 = vld [vmem:[%s1 + $0x8] sm:$0xff]
    %v271 = vld [vmem:[%s1 + $0x10] sm:$0xff]
    %v272 = vld [vmem:[%s1 + $0x18] sm:$0xff]
    %v273 = vld [vmem:[%s1 + $0x20] sm:$0xff]
    %v274 = vld [vmem:[%s1 + $0x28] sm:$0xff]
    %v275 = vld [vmem:[%s1 + $0x30] sm:$0xff]
    %v276 = vld [vmem:[%s1 + $0x38] sm:$0xff]
    %v277 = vld [vmem:[%s1 + $0x40] sm:$0xff]
    %v278 = vld [vmem:[%s1 + $0x48] sm:$0xff]
    %v279 = vld [vmem:[%s1 + $0x50] sm:$0xff]
    %v280 = vld [vmem:[%s1 + $0x58] sm:$0xff]
    %v281 = vld [vmem:[%s1 + $0x60] sm:$0xff]
    %v282 = vld [vmem:[%s1 + $0x68] sm:$0xff]
    %v283 = vld [vmem:[%s1 + $0x70] sm:$0xff]
    %v284 = vld [vmem:[%s1 + $0x78] sm:$0xff]
    %v285 = vld [vmem:[%s5] sm:$0xff]
    %vm286 = vcmask 261120
    %v288 = vsel %vm286, %v269, 0
    %v291 = vsel %vm286, %v270, 0
    %v294 = vsel %vm286, %v271, 0
    %v297 = vsel %vm286, %v272, 0
    %v300 = vsel %vm286, %v273, 0
    %v303 = vsel %vm286, %v274, 0
    %v306 = vsel %vm286, %v275, 0
    %v309 = vsel %vm286, %v276, 0
    %v312 = vsel %vm286, %v277, 0
    %v315 = vsel %vm286, %v278, 0
    %v318 = vsel %vm286, %v279, 0
    %v321 = vsel %vm286, %v280, 0
    %v324 = vsel %vm286, %v281, 0
    %v327 = vsel %vm286, %v282, 0
    %v330 = vsel %vm286, %v283, 0
    %v333 = vsel %vm286, %v284, 0
    %v336 = vsel %vm286, %v285, 0
    %338 = vmatprep.subr.mxu0 0.0
    %339 = vmatpush1.xpose.msra.mxu0 %v336
    %340 = vmatprep.subr.mxu0 0.0
    %341 = vmatpush1.xpose.msra.mxu0 0.0
    %342 = vmatprep.subr.mxu0 0.0
    %343 = vmatpush1.xpose.msra.mxu0 0.0
    %344 = vmatprep.subr.mxu0 0.0
    %345 = vmatpush1.xpose.msra.mxu0 0.0
    %346 = vmatprep.subr.mxu0 0.0
    %347 = vmatpush1.xpose.msra.mxu0 0.0
    %348 = vmatprep.subr.mxu0 0.0
    %349 = vmatpush1.xpose.msra.mxu0 0.0
    %350 = vmatprep.subr.mxu0 0.0
    %351 = vmatpush1.xpose.msra.mxu0 0.0
    %352 = vmatprep.subr.mxu0 0.0
    %353 = vmatpush1.xpose.msra.mxu0 0.0
    %354 = vmatprep.subr.mxu0 0.0
    %355 = vmatpush1.xpose.msra.mxu0 0.0
    %356 = vmatprep.subr.mxu0 0.0
    %357 = vmatpush1.xpose.msra.mxu0 0.0
    %358 = vmatprep.subr.mxu0 0.0
    %359 = vmatpush1.xpose.msra.mxu0 0.0
    %360 = vmatprep.subr.mxu0 0.0
    %361 = vmatpush1.xpose.msra.mxu0 0.0
    %362 = vmatprep.subr.mxu0 0.0
    %363 = vmatpush1.xpose.msra.mxu0 0.0
    %364 = vmatprep.subr.mxu0 0.0
    %365 = vmatpush1.xpose.msra.mxu0 0.0
    %366 = vmatprep.subr.mxu0 0.0
    %367 = vmatpush1.xpose.msra.mxu0 0.0
    %368 = vmatprep.subr.mxu0 0.0
    %369 = vmatpush1.xpose.msra.mxu0 0.0
    %370 = vmatprep.subr.mxu0 0.0
    %371 = vmatpush1.xpose.msra.mxu0 0.0
    %372 = vmatprep.subr.mxu0 0.0
    %373 = vmatpush1.xpose.msra.mxu0 0.0
    %374 = vmatprep.subr.mxu0 0.0
    %375 = vmatpush1.xpose.msra.mxu0 0.0
    %376 = vmatprep.subr.mxu0 0.0
    %377 = vmatpush1.xpose.msra.mxu0 0.0
    %378 = vmatprep.subr.mxu0 0.0
    %379 = vmatpush1.xpose.msra.mxu0 0.0
    %380 = vmatprep.subr.mxu0 0.0
    %381 = vmatpush1.xpose.msra.mxu0 0.0
    %382 = vmatprep.subr.mxu0 0.0
    %383 = vmatpush1.xpose.msra.mxu0 0.0
    %384 = vmatprep.subr.mxu0 0.0
    %385 = vmatpush1.xpose.msra.mxu0 0.0
    %386 = vmatprep.subr.mxu0 0.0
    %387 = vmatpush1.xpose.msra.mxu0 0.0
    %388 = vmatprep.subr.mxu0 0.0
    %389 = vmatpush1.xpose.msra.mxu0 0.0
    %390 = vmatprep.subr.mxu0 0.0
    %391 = vmatpush1.xpose.msra.mxu0 0.0
    %392 = vmatprep.subr.mxu0 0.0
    %393 = vmatpush1.xpose.msra.mxu0 0.0
    %394 = vmatprep.subr.mxu0 0.0
    %395 = vmatpush1.xpose.msra.mxu0 0.0
    %396 = vmatprep.subr.mxu0 0.0
    %397 = vmatpush1.xpose.msra.mxu0 0.0
    %398 = vmatprep.subr.mxu0 0.0
    %399 = vmatpush1.xpose.msra.mxu0 0.0
    %400 = vmatprep.subr.mxu0 0.0
    %401 = vmatpush1.xpose.msra.mxu0 0.0
    %402 = vmatprep.mubr.f32.mxu0 0.0
    %403 = vmatmul.mubr.f32.gmra.mrb[0].mxu0 %v288
    %v404 = vpop.f32.mrb[0].mxu0
    %v405 = vadd.f32 0.0, %v404
    %v406 = vpop.f32.mrb[0].mxu0
    %407 = vmatprep.mubr.f32.mxu0 0.0
    %408 = vmatmul.mubr.f32.gmra.mrb[0].mxu0 %v291
    %v409 = vpop.f32.mrb[0].mxu0
    %v410 = vadd.f32 0.0, %v409
    %v411 = vpop.f32.mrb[0].mxu0
    %412 = vmatprep.mubr.f32.mxu0 0.0
    %413 = vmatmul.mubr.f32.gmra.mrb[0].mxu0 %v294
    %v414 = vpop.f32.mrb[0].mxu0
    %v415 = vadd.f32 0.0, %v414
    %v416 = vpop.f32.mrb[0].mxu0
    %417 = vmatprep.mubr.f32.mxu0 0.0
    %418 = vmatmul.mubr.f32.gmra.mrb[0].mxu0 %v297
    %v419 = vpop.f32.mrb[0].mxu0
    %v420 = vadd.f32 0.0, %v419
    %v421 = vpop.f32.mrb[0].mxu0
    %422 = vmatprep.mubr.f32.mxu0 0.0
    %423 = vmatmul.mubr.f32.gmra.mrb[0].mxu0 %v300
    %v424 = vpop.f32.mrb[0].mxu0
    %v425 = vadd.f32 0.0, %v424
    %v426 = vpop.f32.mrb[0].mxu0
    %427 = vmatprep.mubr.f32.mxu0 0.0
    %428 = vmatmul.mubr.f32.gmra.mrb[0].mxu0 %v303
    %v429 = vpop.f32.mrb[0].mxu0
    %v430 = vadd.f32 0.0, %v429
    %v431 = vpop.f32.mrb[0].mxu0
    %432 = vmatprep.mubr.f32.mxu0 0.0
    %433 = vmatmul.mubr.f32.gmra.mrb[0].mxu0 %v306
    %v434 = vpop.f32.mrb[0].mxu0
    %v435 = vadd.f32 0.0, %v434
    %v436 = vpop.f32.mrb[0].mxu0
    %437 = vmatprep.mubr.f32.mxu0 0.0
    %438 = vmatmul.mubr.f32.gmra.mrb[0].mxu0 %v309
    %v439 = vpop.f32.mrb[0].mxu0
    %v440 = vadd.f32 0.0, %v439
    %v441 = vpop.f32.mrb[0].mxu0
    %442 = vmatprep.mubr.f32.mxu0 0.0
    %443 = vmatmul.mubr.f32.gmra.mrb[0].mxu0 %v312
    %v444 = vpop.f32.mrb[0].mxu0
    %v445 = vadd.f32 0.0, %v444
    %v446 = vpop.f32.mrb[0].mxu0
    %447 = vmatprep.mubr.f32.mxu0 0.0
    %448 = vmatmul.mubr.f32.gmra.mrb[0].mxu0 %v315
    %v449 = vpop.f32.mrb[0].mxu0
    %v450 = vadd.f32 0.0, %v449
    %v451 = vpop.f32.mrb[0].mxu0
    %452 = vmatprep.mubr.f32.mxu0 0.0
    %453 = vmatmul.mubr.f32.gmra.mrb[0].mxu0 %v318
    %v454 = vpop.f32.mrb[0].mxu0
    %v455 = vadd.f32 0.0, %v454
    %v456 = vpop.f32.mrb[0].mxu0
    %457 = vmatprep.mubr.f32.mxu0 0.0
    %458 = vmatmul.mubr.f32.gmra.mrb[0].mxu0 %v321
    %v459 = vpop.f32.mrb[0].mxu0
    %v460 = vadd.f32 0.0, %v459
    %v461 = vpop.f32.mrb[0].mxu0
    %462 = vmatprep.mubr.f32.mxu0 0.0
    %463 = vmatmul.mubr.f32.gmra.mrb[0].mxu0 %v324
    %v464 = vpop.f32.mrb[0].mxu0
    %v465 = vadd.f32 0.0, %v464
    %v466 = vpop.f32.mrb[0].mxu0
    %467 = vmatprep.mubr.f32.mxu0 0.0
    %468 = vmatmul.mubr.f32.gmra.mrb[0].mxu0 %v327
    %v469 = vpop.f32.mrb[0].mxu0
    %v470 = vadd.f32 0.0, %v469
    %v471 = vpop.f32.mrb[0].mxu0
    %472 = vmatprep.mubr.f32.mxu0 0.0
    %473 = vmatmul.mubr.f32.gmra.mrb[0].mxu0 %v330
    %v474 = vpop.f32.mrb[0].mxu0
    %v475 = vadd.f32 0.0, %v474
    %v476 = vpop.f32.mrb[0].mxu0
    %477 = vmatprep.mubr.f32.mxu0 0.0
    %478 = vmatmul.mubr.f32.gmra.mrb[0].mxu0 %v333
    %v479 = vpop.f32.mrb[0].mxu0
    %v480 = vadd.f32 0.0, %v479
    %v481 = vpop.f32.mrb[0].mxu0
    %482 = vdwg.mxu0
    %v484 = vsel %vm286, %v190, 0
    %v487 = vsel %vm286, %v195, 0
    %v490 = vsel %vm286, %v200, 0
    %v493 = vsel %vm286, %v205, 0
    %v496 = vsel %vm286, %v210, 0
    %v499 = vsel %vm286, %v215, 0
    %v502 = vsel %vm286, %v220, 0
    %v505 = vsel %vm286, %v225, 0
    %v508 = vsel %vm286, %v230, 0
    %v511 = vsel %vm286, %v235, 0
    %v514 = vsel %vm286, %v240, 0
    %v517 = vsel %vm286, %v245, 0
    %v520 = vsel %vm286, %v250, 0
    %v523 = vsel %vm286, %v255, 0
    %v526 = vsel %vm286, %v260, 0
    %v529 = vsel %vm286, %v265, 0
    %v532 = vsel %vm286, %v268, 0
    %534 = vmatprep.subr.mxu0 0.0
    %535 = vmatpush1.xpose.msra.mxu0 %v532
    %536 = vmatprep.subr.mxu0 0.0
    %537 = vmatpush1.xpose.msra.mxu0 0.0
    %538 = vmatprep.subr.mxu0 0.0
    %539 = vmatpush1.xpose.msra.mxu0 0.0
    %540 = vmatprep.subr.mxu0 0.0
    %541 = vmatpush1.xpose.msra.mxu0 0.0
    %542 = vmatprep.subr.mxu0 0.0
    %543 = vmatpush1.xpose.msra.mxu0 0.0
    %544 = vmatprep.subr.mxu0 0.0
    %545 = vmatpush1.xpose.msra.mxu0 0.0
    %546 = vmatprep.subr.mxu0 0.0
    %547 = vmatpush1.xpose.msra.mxu0 0.0
    %548 = vmatprep.subr.mxu0 0.0
    %549 = vmatpush1.xpose.msra.mxu0 0.0
    %550 = vmatprep.subr.mxu0 0.0
    %551 = vmatpush1.xpose.msra.mxu0 0.0
    %552 = vmatprep.subr.mxu0 0.0
    %553 = vmatpush1.xpose.msra.mxu0 0.0
    %554 = vmatprep.subr.mxu0 0.0
    %555 = vmatpush1.xpose.msra.mxu0 0.0
    %556 = vmatprep.subr.mxu0 0.0
    %557 = vmatpush1.xpose.msra.mxu0 0.0
    %558 = vmatprep.subr.mxu0 0.0
    %559 = vmatpush1.xpose.msra.mxu0 0.0
    %560 = vmatprep.subr.mxu0 0.0
    %561 = vmatpush1.xpose.msra.mxu0 0.0
    %562 = vmatprep.subr.mxu0 0.0
    %563 = vmatpush1.xpose.msra.mxu0 0.0
    %564 = vmatprep.subr.mxu0 0.0
    %565 = vmatpush1.xpose.msra.mxu0 0.0
    %566 = vmatprep.subr.mxu0 0.0
    %567 = vmatpush1.xpose.msra.mxu0 0.0
    %568 = vmatprep.subr.mxu0 0.0
    %569 = vmatpush1.xpose.msra.mxu0 0.0
    %570 = vmatprep.subr.mxu0 0.0
    %571 = vmatpush1.xpose.msra.mxu0 0.0
    %572 = vmatprep.subr.mxu0 0.0
    %573 = vmatpush1.xpose.msra.mxu0 0.0
    %574 = vmatprep.subr.mxu0 0.0
    %575 = vmatpush1.xpose.msra.mxu0 0.0
    %576 = vmatprep.subr.mxu0 0.0
    %577 = vmatpush1.xpose.msra.mxu0 0.0
    %578 = vmatprep.subr.mxu0 0.0
    %579 = vmatpush1.xpose.msra.mxu0 0.0
    %580 = vmatprep.subr.mxu0 0.0
    %581 = vmatpush1.xpose.msra.mxu0 0.0
    %582 = vmatprep.subr.mxu0 0.0
    %583 = vmatpush1.xpose.msra.mxu0 0.0
    %584 = vmatprep.subr.mxu0 0.0
    %585 = vmatpush1.xpose.msra.mxu0 0.0
    %586 = vmatprep.subr.mxu0 0.0
    %587 = vmatpush1.xpose.msra.mxu0 0.0
    %588 = vmatprep.subr.mxu0 0.0
    %589 = vmatpush1.xpose.msra.mxu0 0.0
    %590 = vmatprep.subr.mxu0 0.0
    %591 = vmatpush1.xpose.msra.mxu0 0.0
    %592 = vmatprep.subr.mxu0 0.0
    %593 = vmatpush1.xpose.msra.mxu0 0.0
    %594 = vmatprep.subr.mxu0 0.0
    %595 = vmatpush1.xpose.msra.mxu0 0.0
    %596 = vmatprep.subr.mxu0 0.0
    %597 = vmatpush1.xpose.msra.mxu0 0.0
    %598 = vmatprep.mubr.f32.mxu0 0.0
    %599 = vmatmul.mubr.f32.gmra.mrb[0].mxu0 %v484
    %v600 = vpop.f32.mrb[0].mxu0
    %v601 = vadd.f32 %v405, %v600
    %v602 = vpop.f32.mrb[0].mxu0
    %603 = vmatprep.mubr.f32.mxu0 0.0
    %604 = vmatmul.mubr.f32.gmra.mrb[0].mxu0 %v487
    %v605 = vpop.f32.mrb[0].mxu0
    %v606 = vadd.f32 %v410, %v605
    %v607 = vpop.f32.mrb[0].mxu0
    %608 = vmatprep.mubr.f32.mxu0 0.0
    %609 = vmatmul.mubr.f32.gmra.mrb[0].mxu0 %v490
    %v610 = vpop.f32.mrb[0].mxu0
    %v611 = vadd.f32 %v415, %v610
    %v612 = vpop.f32.mrb[0].mxu0
    %613 = vmatprep.mubr.f32.mxu0 0.0
    %614 = vmatmul.mubr.f32.gmra.mrb[0].mxu0 %v493
    %v615 = vpop.f32.mrb[0].mxu0
    %v616 = vadd.f32 %v420, %v615
    %v617 = vpop.f32.mrb[0].mxu0
    %618 = vmatprep.mubr.f32.mxu0 0.0
    %619 = vmatmul.mubr.f32.gmra.mrb[0].mxu0 %v496
    %v620 = vpop.f32.mrb[0].mxu0
    %v621 = vadd.f32 %v425, %v620
    %v622 = vpop.f32.mrb[0].mxu0
    %623 = vmatprep.mubr.f32.mxu0 0.0
    %624 = vmatmul.mubr.f32.gmra.mrb[0].mxu0 %v499
    %v625 = vpop.f32.mrb[0].mxu0
    %v626 = vadd.f32 %v430, %v625
    %v627 = vpop.f32.mrb[0].mxu0
    %628 = vmatprep.mubr.f32.mxu0 0.0
    %629 = vmatmul.mubr.f32.gmra.mrb[0].mxu0 %v502
    %v630 = vpop.f32.mrb[0].mxu0
    %v631 = vadd.f32 %v435, %v630
    %v632 = vpop.f32.mrb[0].mxu0
    %633 = vmatprep.mubr.f32.mxu0 0.0
    %634 = vmatmul.mubr.f32.gmra.mrb[0].mxu0 %v505
    %v635 = vpop.f32.mrb[0].mxu0
    %v636 = vadd.f32 %v440, %v635
    %v637 = vpop.f32.mrb[0].mxu0
    %638 = vmatprep.mubr.f32.mxu0 0.0
    %639 = vmatmul.mubr.f32.gmra.mrb[0].mxu0 %v508
    %v640 = vpop.f32.mrb[0].mxu0
    %v641 = vadd.f32 %v445, %v640
    %v642 = vpop.f32.mrb[0].mxu0
    %643 = vmatprep.mubr.f32.mxu0 0.0
    %644 = vmatmul.mubr.f32.gmra.mrb[0].mxu0 %v511
    %v645 = vpop.f32.mrb[0].mxu0
    %v646 = vadd.f32 %v450, %v645
    %v647 = vpop.f32.mrb[0].mxu0
    %648 = vmatprep.mubr.f32.mxu0 0.0
    %649 = vmatmul.mubr.f32.gmra.mrb[0].mxu0 %v514
    %v650 = vpop.f32.mrb[0].mxu0
    %v651 = vadd.f32 %v455, %v650
    %v652 = vpop.f32.mrb[0].mxu0
    %653 = vmatprep.mubr.f32.mxu0 0.0
    %654 = vmatmul.mubr.f32.gmra.mrb[0].mxu0 %v517
    %v655 = vpop.f32.mrb[0].mxu0
    %v656 = vadd.f32 %v460, %v655
    %v657 = vpop.f32.mrb[0].mxu0
    %658 = vmatprep.mubr.f32.mxu0 0.0
    %659 = vmatmul.mubr.f32.gmra.mrb[0].mxu0 %v520
    %v660 = vpop.f32.mrb[0].mxu0
    %v661 = vadd.f32 %v465, %v660
    %v662 = vpop.f32.mrb[0].mxu0
    %663 = vmatprep.mubr.f32.mxu0 0.0
    %664 = vmatmul.mubr.f32.gmra.mrb[0].mxu0 %v523
    %v665 = vpop.f32.mrb[0].mxu0
    %v666 = vadd.f32 %v470, %v665
    %v667 = vpop.f32.mrb[0].mxu0
    %668 = vmatprep.mubr.f32.mxu0 0.0
    %669 = vmatmul.mubr.f32.gmra.mrb[0].mxu0 %v526
    %v670 = vpop.f32.mrb[0].mxu0
    %v671 = vadd.f32 %v475, %v670
    %v672 = vpop.f32.mrb[0].mxu0
    %673 = vmatprep.mubr.f32.mxu0 0.0
    %674 = vmatmul.mubr.f32.gmra.mrb[0].mxu0 %v529
    %v675 = vpop.f32.mrb[0].mxu0
    %v676 = vadd.f32 %v480, %v675
    %v677 = vpop.f32.mrb[0].mxu0
    %678 = vdwg.mxu0
    %v679 = vld [vmem:[%s6] sm:$0x1]
    %v681 = vlaneseq
    %v682 = vshrl.u32 %v681, 7
    %v683 = vsub.s32 0, %v682
    %v684 = vrot.slane %v679, %v683
    %v686 = vadd.f32 %v601, %v684
    %v687 = vadd.f32 %v606, %v684
    %v688 = vadd.f32 %v611, %v684
    %v689 = vadd.f32 %v616, %v684
    %v690 = vadd.f32 %v621, %v684
    %v691 = vadd.f32 %v626, %v684
    %v692 = vadd.f32 %v631, %v684
    %v693 = vadd.f32 %v636, %v684
    %v694 = vadd.f32 %v641, %v684
    %v695 = vadd.f32 %v646, %v684
    %v696 = vadd.f32 %v651, %v684
    %v697 = vadd.f32 %v656, %v684
    %v698 = vadd.f32 %v661, %v684
    %v699 = vadd.f32 %v666, %v684
    %v700 = vadd.f32 %v671, %v684
    %v701 = vadd.f32 %v676, %v684
    %v702 = vmax.f32 %v686, 0.0
    %v703 = vmax.f32 %v687, 0.0
    %v704 = vmax.f32 %v688, 0.0
    %v705 = vmax.f32 %v689, 0.0
    %v706 = vmax.f32 %v690, 0.0
    %v707 = vmax.f32 %v691, 0.0
    %v708 = vmax.f32 %v692, 0.0
    %v709 = vmax.f32 %v693, 0.0
    %v710 = vmax.f32 %v694, 0.0
    %v711 = vmax.f32 %v695, 0.0
    %v712 = vmax.f32 %v696, 0.0
    %v713 = vmax.f32 %v697, 0.0
    %v714 = vmax.f32 %v698, 0.0
    %v715 = vmax.f32 %v699, 0.0
    %v716 = vmax.f32 %v700, 0.0
    %v717 = vmax.f32 %v701, 0.0
    %v718 = vld [vmem:[%s7] sm:$0x1]
    %v719 = vld [vmem:[#allocation2] sm:$0x1]
    %721 = vset.pattern.permute.xlu0 0
    %722 = vperm.xlu0 %721, %v719
    %v723 = vpop.permute.xlu0 %722
    %v725 = vlaneseq
    %v726 = vshrl.u32 %v725, 7
    %v727 = vsub.s32 0, %v726
    %v728 = vrot.slane %v723, %v727
    %vm729 = vcmask 64512
    %v731 = vsel %vm729, %v718, 0
    %v734 = vsel %vm729, %v702, 0
    %v737 = vsel %vm729, %v703, 0
    %v740 = vsel %vm729, %v704, 0
    %v743 = vsel %vm729, %v705, 0
    %v746 = vsel %vm729, %v706, 0
    %v749 = vsel %vm729, %v707, 0
    %v752 = vsel %vm729, %v708, 0
    %v755 = vsel %vm729, %v709, 0
    %v758 = vsel %vm729, %v710, 0
    %v761 = vsel %vm729, %v711, 0
    %v764 = vsel %vm729, %v712, 0
    %v767 = vsel %vm729, %v713, 0
    %v770 = vsel %vm729, %v714, 0
    %v773 = vsel %vm729, %v715, 0
    %v776 = vsel %vm729, %v716, 0
    %v779 = vsel %vm729, %v717, 0
    %781 = vmatprep.subr.mxu0 0.0
    %782 = vmatpush1.xpose.msra.mxu0 %v734
    %783 = vmatprep.subr.mxu0 0.0
    %784 = vmatpush1.xpose.msra.mxu0 %v737
    %785 = vmatprep.subr.mxu0 0.0
    %786 = vmatpush1.xpose.msra.mxu0 %v740
    %787 = vmatprep.subr.mxu0 0.0
    %788 = vmatpush1.xpose.msra.mxu0 %v743
    %789 = vmatprep.subr.mxu0 0.0
    %790 = vmatpush1.xpose.msra.mxu0 %v746
    %791 = vmatprep.subr.mxu0 0.0
    %792 = vmatpush1.xpose.msra.mxu0 %v749
    %793 = vmatprep.subr.mxu0 0.0
    %794 = vmatpush1.xpose.msra.mxu0 %v752
    %795 = vmatprep.subr.mxu0 0.0
    %796 = vmatpush1.xpose.msra.mxu0 %v755
    %797 = vmatprep.subr.mxu0 0.0
    %798 = vmatpush1.xpose.msra.mxu0 %v758
    %799 = vmatprep.subr.mxu0 0.0
    %800 = vmatpush1.xpose.msra.mxu0 %v761
    %801 = vmatprep.subr.mxu0 0.0
    %802 = vmatpush1.xpose.msra.mxu0 %v764
    %803 = vmatprep.subr.mxu0 0.0
    %804 = vmatpush1.xpose.msra.mxu0 %v767
    %805 = vmatprep.subr.mxu0 0.0
    %806 = vmatpush1.xpose.msra.mxu0 %v770
    %807 = vmatprep.subr.mxu0 0.0
    %808 = vmatpush1.xpose.msra.mxu0 %v773
    %809 = vmatprep.subr.mxu0 0.0
    %810 = vmatpush1.xpose.msra.mxu0 %v776
    %811 = vmatprep.subr.mxu0 0.0
    %812 = vmatpush1.xpose.msra.mxu0 %v779
    %813 = vmatprep.subr.mxu0 0.0
    %814 = vmatpush1.xpose.msra.mxu0 0.0
    %815 = vmatprep.subr.mxu0 0.0
    %816 = vmatpush1.xpose.msra.mxu0 0.0
    %817 = vmatprep.subr.mxu0 0.0
    %818 = vmatpush1.xpose.msra.mxu0 0.0
    %819 = vmatprep.subr.mxu0 0.0
    %820 = vmatpush1.xpose.msra.mxu0 0.0
    %821 = vmatprep.subr.mxu0 0.0
    %822 = vmatpush1.xpose.msra.mxu0 0.0
    %823 = vmatprep.subr.mxu0 0.0
    %824 = vmatpush1.xpose.msra.mxu0 0.0
    %825 = vmatprep.subr.mxu0 0.0
    %826 = vmatpush1.xpose.msra.mxu0 0.0
    %827 = vmatprep.subr.mxu0 0.0
    %828 = vmatpush1.xpose.msra.mxu0 0.0
    %829 = vmatprep.subr.mxu0 0.0
    %830 = vmatpush1.xpose.msra.mxu0 0.0
    %831 = vmatprep.subr.mxu0 0.0
    %832 = vmatpush1.xpose.msra.mxu0 0.0
    %833 = vmatprep.subr.mxu0 0.0
    %834 = vmatpush1.xpose.msra.mxu0 0.0
    %835 = vmatprep.subr.mxu0 0.0
    %836 = vmatpush1.xpose.msra.mxu0 0.0
    %837 = vmatprep.subr.mxu0 0.0
    %838 = vmatpush1.xpose.msra.mxu0 0.0
    %839 = vmatprep.subr.mxu0 0.0
    %840 = vmatpush1.xpose.msra.mxu0 0.0
    %841 = vmatprep.subr.mxu0 0.0
    %842 = vmatpush1.xpose.msra.mxu0 0.0
    %843 = vmatprep.subr.mxu0 0.0
    %844 = vmatpush1.xpose.msra.mxu0 0.0
    %845 = vmatprep.mubr.f32.mxu0 0.0
    %846 = vmatmul.mubr.f32.gmra.mrb[0].mxu0 %v731
    %v847 = vpop.f32.mrb[0].mxu0
    %v848 = vadd.f32 %v728, %v847
    %v849 = vpop.f32.mrb[0].mxu0
    %850 = vdwg.mxu0
    %v851 = vxor.u32 %v848, 2147483648
    %v852 = vmul.f32 %v851, 1.442695
    %v853 = vpow.pop %v852
    %v854 = vadd.f32 %v853, 1.0
    %v855 = vrcp.pop %v854
    %v856 = vmul.f32 1.0, %v855
    %857 = vst [vmem:[#allocation3] sm:$0x1] %v856
    // Predicated region
    $region38: #{tpu_custom_call.1} parent=1 // pred_check
      _
    $region39: #{tpu_custom_call.1} parent=1 // pred_check_branch
      %859 = sbr.rel (0) target = $region41
    $region40: #{tpu_custom_call.1} parent=1 // pred_region
      %s861 = ssub.s32 16, 16
      %862 = vsyncadd [#allocation4], %s861
      %s864 = sshll.u32 [#allocation3], 4
      %s865 = int_to_ptr.vmem [resolvable:$true] %s864
      %867 = dma.vmem_to_hbm [thread:$0]  %s865, 16, %s9, [#allocation4]
    $region41: #{tpu_custom_call.1} parent=1 // pred_fallthru
      _
    // Predicated region
    $region42: #{tpu_custom_call.1} parent=1 // pred_check
      _
    $region43: #{tpu_custom_call.1} parent=1 // pred_check_branch
      %869 = sbr.rel (0) target = $region45
    $region44: #{tpu_custom_call.1} parent=1 // pred_region
      %870 = dma.done [#allocation4], 16
    $region45: #{tpu_custom_call.1} parent=1 // pred_fallthru
      _
    %871 = vsyncpa [#allocation4], 1

</llo_original>
